<compile_context>
chip_gen: v6e
topology: v6e:2x2x1
jax: 0.10.0
libtpu: 0.0.40
codegen_flags: <defaults>
</compile_context>

<pallas_src>
import jax
import jax.numpy as jnp
from jax.experimental import pallas as pl
from jax.experimental.pallas import tpu as pltpu

_LANE = 128
_SUBLANE = 8
_TARGET_BLOCK_BYTES = 4 << 20   # ~4 MiB per (tR, tT) block
_MAX_BLOCK_BYTES = 8 << 20      # keep double-buffered total well under VMEM


def _round_up(v, m):
    return (v + m - 1) // m * m


def snake_beta_kernel(x_ref, a2_ref, hb_ref, o_ref):
    # x_ref/o_ref: (tR, tT) tile.  a2_ref/hb_ref: (tR, 1) f32 per-row params
    # (a2 = 2*exp(alpha), hb = 0.5/(exp(beta)+eps)).
    #   y = x + hb * (1 - cos(a2*x))  ==  x + sin(x*exp(alpha))^2 / (exp(beta)+eps)
    x = x_ref[...].astype(jnp.float32)
    c = jnp.cos(x * a2_ref[...])                  # (tR,1) broadcasts over lanes
    o_ref[...] = (x + hb_ref[...] * (1.0 - c)).astype(o_ref.dtype)


def snake_beta_pallas(x, alpha, beta):
    """x: (B, C, T); alpha, beta: (C,) log-scale params (alpha_logscale=True)."""
    B, C, T = x.shape
    R = B * C
    itemsize = jnp.dtype(x.dtype).itemsize

    # ---- hoist the O(C) parameter math out of the kernel (half-angle form) --
    a2 = 2.0 * jnp.exp(alpha.astype(jnp.float32))
    hb = 0.5 / (jnp.exp(beta.astype(jnp.float32)) + 1e-9)
    # fold batch into the row axis -> per-row params, keeps sublanes dense
    a2_r = jnp.broadcast_to(a2[None, :], (B, C)).reshape(R, 1)
    hb_r = jnp.broadcast_to(hb[None, :], (B, C)).reshape(R, 1)

    # ---- flatten (B, C, T) -> (R, T); free for the contiguous NCL layout ----
    x2 = x.reshape(R, T)

    # ---- tile sizes: lane-dense time tile, sublane-dense row tile -----------
    tR = R  # full rows by default (always a legal block: equals the array dim)
    tT = (_TARGET_BLOCK_BYTES // max(tR * itemsize, 1)) // _LANE * _LANE
    tT = max(_LANE, tT)
    tT = min(tT, _round_up(T, _LANE))            # never bigger than needed
    # if full rows alone blow the block budget, tile rows too (needs R % 8 == 0
    # so that a partial-row block is a legal (multiple-of-8) block shape)
    if tR * tT * itemsize > _MAX_BLOCK_BYTES and R % _SUBLANE == 0:
        tR = (_MAX_BLOCK_BYTES // (tT * itemsize)) // _SUBLANE * _SUBLANE
        tR = min(max(_SUBLANE, tR), R)

    grid_r = pl.cdiv(R, tR)
    grid_t = pl.cdiv(T, tT)

    # v7x has 2 TensorCores: make sure there are >= 2 parallel grid steps
    if grid_r * grid_t < 2:
        if T > _LANE:
            tT = max(_LANE, pl.cdiv(pl.cdiv(T, 2), _LANE) * _LANE)
            grid_t = pl.cdiv(T, tT)
        elif R > _SUBLANE and R % _SUBLANE == 0:
            tR = max(_SUBLANE, pl.cdiv(pl.cdiv(R, 2), _SUBLANE) * _SUBLANE)
            grid_r = pl.cdiv(R, tR)

    grid = (grid_r, grid_t)

    # explicit VMEM budget: double-buffered in + out blocks + params + headroom
    block_bytes = tR * tT * itemsize
    vmem_limit = 4 * block_bytes + 4 * 2 * tR * 4 + (2 << 20)
    vmem_limit = max(int(vmem_limit), 4 << 20)

    out2 = pl.pallas_call(
        snake_beta_kernel,
        out_shape=jax.ShapeDtypeStruct((R, T), x.dtype),
        grid_spec=pltpu.PrefetchScalarGridSpec(
            num_scalar_prefetch=0,
            grid=grid,
            in_specs=[
                pl.BlockSpec((tR, tT), lambda r, t: (r, t)),
                pl.BlockSpec((tR, 1), lambda r, t: (r, 0)),
                pl.BlockSpec((tR, 1), lambda r, t: (r, 0)),
            ],
            out_specs=pl.BlockSpec((tR, tT), lambda r, t: (r, t)),
        ),
        compiler_params=pltpu.CompilerParams(
            dimension_semantics=("parallel", "parallel"),
            vmem_limit_bytes=vmem_limit,
        ),
    )(x2, a2_r, hb_r)

    return out2.reshape(B, C, T)


def snake_beta_reference(x, alpha, beta):
    a = jnp.exp(alpha)[None, :, None]
    b = jnp.exp(beta)[None, :, None]
    return x + 1.0 / (b + 1e-9) * jnp.sin(x * a) ** 2


def _check(B, C, T, key):
    kx, ka, kb = jax.random.split(key, 3)
    x = jax.random.normal(kx, (B, C, T), dtype=jnp.float32)
    # Module __init__ (alpha_logscale=True) uses zeros(C); small random
    # log-scale values exercise the exp/broadcast paths non-trivially.
    alpha = 0.1 * jax.random.normal(ka, (C,), dtype=jnp.float32)
    beta = 0.1 * jax.random.normal(kb, (C,), dtype=jnp.float32)

    y = jax.block_until_ready(snake_beta_pallas(x, alpha, beta))
    y_ref = snake_beta_reference(x, alpha, beta)
    assert y.shape == (B, C, T)
    assert jnp.allclose(y, y_ref, atol=1e-5, rtol=1e-5), (
        f"mismatch vs reference at shape {(B, C, T)}")


if __name__ == "__main__":
    key = jax.random.PRNGKey(0)
    k1, k2 = jax.random.split(key)

    # primary small case consistent with the module (B, C, T) = (2, 4, 16)
    _check(2, 4, 16, k1)
    # secondary case exercising the multi-tile grid and ragged last time block
    _check(1, 12, 300, k2)

    print("KERNEL_OK")
</pallas_src>

<mosaic_0001>
module attributes {stable_mosaic.version = 11 : i64} {
  func.func @snake_beta_kernel(%arg0: i32, %arg1: i32, %arg2: memref<8x128xf32, #tpu.memory_space<vmem>>, %arg3: memref<8x1xf32, #tpu.memory_space<vmem>>, %arg4: memref<8x1xf32, #tpu.memory_space<vmem>>, %arg5: memref<8x128xf32, #tpu.memory_space<vmem>>) attributes {dimension_semantics = [#tpu.dimension_semantics<parallel>, #tpu.dimension_semantics<parallel>], iteration_bounds = array<i64: 1, 1>, scalar_prefetch = 0 : i64, scratch_operands = 0 : i64, tpu.core_type = #tpu.core_type<tc>, window_params = [{transform_indices = @transform_0, window_bounds = array<i64: 8, 128>}, {transform_indices = @transform_1, window_bounds = array<i64: 8, 1>}, {transform_indices = @transform_2, window_bounds = array<i64: 8, 1>}, {transform_indices = @transform_3, window_bounds = array<i64: 8, 128>}]} {
    %c0 = arith.constant 0 : index
    %c0_0 = arith.constant 0 : index
    %0 = vector.load %arg2[%c0, %c0_0] : memref<8x128xf32, #tpu.memory_space<vmem>>, vector<8x128xf32>
    %c0_1 = arith.constant 0 : index
    %c0_2 = arith.constant 0 : index
    %1 = vector.load %arg3[%c0_1, %c0_2] : memref<8x1xf32, #tpu.memory_space<vmem>>, vector<8x1xf32>
    %2 = vector.broadcast %1 : vector<8x1xf32> to vector<8x128xf32>
    %3 = arith.mulf %0, %2 : vector<8x128xf32>
    %4 = math.cos %3 : vector<8x128xf32>
    %c0_3 = arith.constant 0 : index
    %c0_4 = arith.constant 0 : index
    %5 = vector.load %arg4[%c0_3, %c0_4] : memref<8x1xf32, #tpu.memory_space<vmem>>, vector<8x1xf32>
    %cst = arith.constant 1.000000e+00 : f32
    %6 = vector.broadcast %cst : f32 to vector<8x128xf32>
    %7 = arith.subf %6, %4 : vector<8x128xf32>
    %8 = vector.broadcast %5 : vector<8x1xf32> to vector<8x128xf32>
    %9 = arith.mulf %8, %7 : vector<8x128xf32>
    %10 = arith.addf %0, %9 : vector<8x128xf32>
    %c0_5 = arith.constant 0 : index
    %c0_6 = arith.constant 0 : index
    %11 = vector.load %arg5[%c0_5, %c0_6] : memref<8x128xf32, #tpu.memory_space<vmem>>, vector<8x128xf32>
    tpu.vector_store %arg5[%c0_5, %c0_6], %10 {strides = array<i32>} : memref<8x128xf32, #tpu.memory_space<vmem>>, vector<8x128xf32>,
    return
  }
  func.func @transform_0(%arg0: i32, %arg1: i32) -> (i32, i32) {
    %c0_i32 = arith.constant 0 : i32
    return %arg0, %arg1 : i32, i32
  }
  func.func @transform_1(%arg0: i32, %arg1: i32) -> (i32, i32) {
    %c0_i32 = arith.constant 0 : i32
    %c0_i32_0 = arith.constant 0 : i32
    return %arg0, %c0_i32 : i32, i32
  }
  func.func @transform_2(%arg0: i32, %arg1: i32) -> (i32, i32) {
    %c0_i32 = arith.constant 0 : i32
    %c0_i32_0 = arith.constant 0 : i32
    return %arg0, %c0_i32 : i32, i32
  }
  func.func @transform_3(%arg0: i32, %arg1: i32) -> (i32, i32) {
    %c0_i32 = arith.constant 0 : i32
    return %arg0, %arg1 : i32, i32
  }
}

</mosaic_0001>

<llo_original>
// kernel: tpu_custom_call.1
$region0: #{tpu_custom_call.1}
  #allocation0 [shape = 'u32[]', space=smem, size = 0x4, offset = 0x4, fixed_abs, tag = 'smem constant byte address 0x4 - core index']
  #allocation1 [shape = 'u32[144,128]{1,0:T(1,128)}', space=vmem, size = 0x12000, scoped, tag = 'internal scratch']
  %s0 = inlined_call_operand.vmem [shape: f32[8,16], index: 0, kind: input, shape index: {}]
  %s1 = inlined_call_operand.vmem [shape: f32[8,1], index: 1, kind: input, shape index: {}]
  %s2 = inlined_call_operand.vmem [shape: f32[8,1], index: 2, kind: input, shape index: {}]
  %s3 = inlined_call_operand.hbm [shape: f32[8,16], index: 3, kind: output, shape index: {}]
  %s4 = sld [smem:[#allocation0]]
  $region22: #{tpu_custom_call.1} parent=0
    _
  %s6 = ssub.s32 1, %s4
  %s7 = scalar_select 0, %s6, %s4
  $region1: #{tpu_custom_call.1} parent=0
    #allocation2 [shape = 'u8[4096]{0}', space=vmem, size = 0x1000, scoped, tag = 'output window, operand 0, single buffered']
    #allocation3 [shape = 's32[1]{0}', space=sflag, size = 0x4, scoped, tag = 'scoped memory for tpu_custom_call.1']
    %8 = vsyncpa [#allocation3], 0
    // Predicated region
    $region2: #{tpu_custom_call.1} parent=1 // pred_check
      _
    $region3: #{tpu_custom_call.1} parent=1 // pred_check_branch
      %10 = sbr.rel (0) target = $region5
    $region4: #{tpu_custom_call.1} parent=1 // pred_region
      _
    $region5: #{tpu_custom_call.1} parent=1 // pred_fallthru
      _
    // Predicated region
    $region6: #{tpu_custom_call.1} parent=1 // pred_check
      _
    $region7: #{tpu_custom_call.1} parent=1 // pred_check_branch
      %12 = sbr.rel (0) target = $region9
    $region8: #{tpu_custom_call.1} parent=1 // pred_region
      _
    $region9: #{tpu_custom_call.1} parent=1 // pred_fallthru
      _
    // Predicated region
    $region10: #{tpu_custom_call.1} parent=1 // pred_check
      _
    $region11: #{tpu_custom_call.1} parent=1 // pred_check_branch
      %14 = sbr.rel (0) target = $region13
    $region12: #{tpu_custom_call.1} parent=1 // pred_region
      _
    $region13: #{tpu_custom_call.1} parent=1 // pred_fallthru
      _
    %v15 = vld [vmem:[%s0] sm:$0xff]
    %v16 = vld [vmem:[%s1] sm:$0xff]
    %18 = vset.pattern.permute.xlu0 0
    %19 = vperm.xlu0 %18, %v16
    %v20 = vpop.permute.xlu0 %19
    %v22 = vmul.f32 %v15, %v20
    %v23 = vand.u32 2147483647, %v22
    %vm24 = vcmp.le.f32.partialorder %v23, 0.7853982
    %vm25 = vcmp.lt.s32.totalorder %v22, 0
    %v26 = vand.u32 %v22, 2139095040
    %v27 = vshrl.u32 %v26, 23
    %v28 = vsub.s32 %v27, 127
    %v29 = vand.u32 2147483647, %v22
    %v30 = vand.u32 %v29, 8388607
    %v31 = vor.u32 %v30, 8388608
    %v32 = vsub.s32 0, %v31
    %v33 = vadd.s32 %v28, 1
    %vm34 = vcmp.gt.s32.totalorder %v33, 0
    %v35 = vsel %vm34, %v33, 0
    %v36 = vshrl.u32 %v35, 5
    %v37 = vand.u32 %v35, 31
    %v38 = vsub.s32 32, %v37
    %v39 = vshrl.u32 683565275, %v38
    %v40 = vshll.u32 683565275, %v37
    %v41 = vshrl.u32 2475754826, %v38
    %v42 = vor.u32 %v40, %v41
    %v43 = vshll.u32 2475754826, %v37
    %v44 = vshrl.u32 2131351028, %v38
    %v45 = vor.u32 %v43, %v44
    %v46 = vshll.u32 2131351028, %v37
    %v47 = vshrl.u32 2102212464, %v38
    %v48 = vor.u32 %v46, %v47
    %v49 = vshll.u32 2102212464, %v37
    %v50 = vshrl.u32 920167782, %v38
    %v51 = vor.u32 %v49, %v50
    %v52 = vshll.u32 920167782, %v37
    %v53 = vshrl.u32 1326507024, %v38
    %v54 = vor.u32 %v52, %v53
    %vm55 = vcmp.lt.s32.totalorder %v36, 1
    %vm56 = vcmp.lt.s32.totalorder %v36, 2
    %vm57 = vcmp.lt.s32.totalorder %v36, 3
    %vm58 = vcmp.lt.s32.totalorder %v36, 4
    %v59 = vsel %vm55, %v39, %v42
    %v60 = vsel %vm58, %v48, 2102212464
    %v61 = vsel %vm57, %v45, %v60
    %v62 = vsel %vm56, %v59, %v61
    %v63 = vsel %vm55, %v42, %v45
    %v64 = vsel %vm58, %v51, 920167782
    %v65 = vsel %vm57, %v48, %v64
    %v66 = vsel %vm56, %v63, %v65
    %v67 = vsel %vm55, %v45, %v48
    %v68 = vsel %vm58, %v54, 1326507024
    %v69 = vsel %vm57, %v51, %v68
    %v70 = vsel %vm56, %v67, %v69
    %v71 = vshll.u32 %v31, 8
    %v72 = vmul.u32.u64.compose %v71, %v70
    %v73 = vextract.low.u32 %v72
    %v74 = vextract.high.u32 %v72
    %v75 = vmul.u32.u64.compose %v71, %v66
    %v76 = vextract.low.u32 %v75
    %v77 = vextract.high.u32 %v75
    %v78 = vmul.u32 %v71, %v62
    %v79 = vadd.s32 %v74, %v76
    %vm80 = vc.u32 %v74, %v76
    %v81 = vadd.s32 %v77, 1
    %v82 = vsel %vm80, %v81, %v77
    %v83 = vadd.s32 %v78, %v82
    %v84 = vadd.s32 %v83, 536870912
    %v85 = vshrl.u32 %v84, 30
    %v86 = vshll.u32 %v85, 30
    %v87 = vsub.s32 %v83, %v86
    %vm88 = vcmp.lt.s32.totalorder %v87, 0
    %v89 = vsub.s32 0, %v87
    %v90 = vsel %vm88, %v89, %v87
    %v91 = vclz %v90
    %v92 = vsub.s32 %v91, 2
    %vm93 = vcmp.gt.s32.totalorder 0, %v92
    %v94 = vsel %vm93, 0, %v92
    %v95 = vsub.s32 32, %v94
    %v96 = vshll.u32 %v87, %v94
    %v97 = vshrl.u32 %v79, %v95
    %v98 = vor.u32 %v96, %v97
    %v99 = vsub.s32 4294967266, %v94
    %v100 = vadd.s32 %v99, 127
    %v101 = vshll.u32 %v100, 23
    %v102 = vor.u32 4788187, %v101
    %v103 = vand.u32 2147483647, %v102
    %v105 = vcvt.s32.f32 %v98
    %v106 = vmul.f32 %v105, %v103
    %v107 = vxor.u32 %v106, 2147483648
    %v108 = vsel %vm25, %v107, %v106
    %v109 = vsub.s32 4, %v85
    %v110 = vsel %vm25, %v109, %v85
    %v111 = vsel %vm24, %v22, %v108
    %v112 = vsel %vm24, 0, %v110
    %v113 = vcosq.f32.pop %v111
    %v114 = vsinq.f32.pop %v111
    %vm115 = vweird.f32 %v22
    %v116 = vand.u32 %v112, 3
    %vm117 = vcmp.lt.s32.totalorder %v116, 2
    %vm118 = vcmp.eq.s32.totalorder %v116, 0
    %v119 = vxor.u32 %v114, 2147483648
    %v120 = vsel %vm118, %v113, %v119
    %vm121 = vcmp.eq.s32.totalorder %v116, 2
    %v122 = vxor.u32 %v113, 2147483648
    %v123 = vsel %vm121, %v122, %v114
    %v124 = vsel %vm117, %v120, %v123
    %v125 = vsel %vm115, nan, %v124
    %v126 = vld [vmem:[%s2] sm:$0xff]
    %v127 = vsub.f32 1.0, %v125
    %129 = vset.pattern.permute.xlu0 0
    %130 = vperm.xlu0 %129, %v126
    %v131 = vpop.permute.xlu0 %130
    %v133 = vmul.f32 %v131, %v127
    %v134 = vadd.f32 %v15, %v133
    %135 = vst [vmem:[#allocation2] sm:$0xff] %v134
    // Predicated region
    $region14: #{tpu_custom_call.1} parent=1 // pred_check
      _
    $region15: #{tpu_custom_call.1} parent=1 // pred_check_branch
      %137 = sbr.rel (0) target = $region17
    $region16: #{tpu_custom_call.1} parent=1 // pred_region
      %s139 = ssub.s32 128, 128
      %140 = vsyncadd [#allocation3], %s139
      %s142 = sshll.u32 [#allocation2], 4
      %s143 = int_to_ptr.vmem [resolvable:$true] %s142
      %145 = dma.vmem_to_hbm [thread:$0]  %s143, 128, %s3, [#allocation3]
    $region17: #{tpu_custom_call.1} parent=1 // pred_fallthru
      _
    // Predicated region
    $region18: #{tpu_custom_call.1} parent=1 // pred_check
      _
    $region19: #{tpu_custom_call.1} parent=1 // pred_check_branch
      %147 = sbr.rel (0) target = $region21
    $region20: #{tpu_custom_call.1} parent=1 // pred_region
      %148 = dma.done [#allocation3], 128
    $region21: #{tpu_custom_call.1} parent=1 // pred_fallthru
      _
    %149 = vsyncpa [#allocation3], 1

</llo_original>
